<compile_context>
chip_gen: v7x
topology: tpu7x:2x2x1
jax: 0.10.0
libtpu: 0.0.40
codegen_flags: <defaults>
</compile_context>

<pallas_src>
import jax
import jax.numpy as jnp
from jax.experimental import pallas as pl
from jax.experimental.pallas import tpu as pltpu


def _round_up(x, m):
    return ((x + m - 1) // m) * m


def _reparam_kernel(mu_ref, logvar_ref, eps_ref, z_ref, kl_ref):
    """Elementwise reparameterization + per-tile per-lane KL partial sums."""
    mu = mu_ref[...].astype(jnp.float32)
    logvar = logvar_ref[...].astype(jnp.float32)
    eps = eps_ref[...].astype(jnp.float32)

    # z = mu + sigma * eps  (reparameterization trick; single EUP exp)
    std = jnp.exp(0.5 * logvar)
    z_ref[...] = (mu + std * eps).astype(z_ref.dtype)

    # KL( N(mu, sigma^2) || N(0, 1) ): reuse std*std instead of a 2nd exp.
    var = std * std
    kl_elem = -0.5 * (1.0 + logvar - mu * mu - var)
    # Reduce only over the sublane (batch) axis; keep per-lane partials so the
    # cross-lane + cross-tile reduce is a single tiny XLA sum outside.
    kl_ref[...] = jnp.sum(kl_elem, axis=0)[None, None, :]


def stochastic_layer_forward(inputs, eps, *, block_rows=None):
    """inputs: (B, 2*D) = [mu | logvar]; eps: (B, D) standard normal noise.

    Returns (z, kl): z is (B, D) with inputs.dtype, kl is a scalar f32.
    """
    B, twoD = inputs.shape
    D = twoD // 2
    assert twoD == 2 * D, "inputs must be (B, 2*D) = [mu | logvar]"
    # Column-split via BlockSpecs requires lane-aligned feature width.
    assert D % 128 == 0, "feature dim D must be a multiple of 128"
    assert eps.shape == (B, D)

    if block_rows is None:
        # ~3 MiB per f32 stream block; with 4 streams x 2 buffers that is
        # ~24 MiB resident — fits v7x's 64 MiB VMEM and the raised limit below.
        target = (3 * 1024 * 1024) // (4 * D)
        block_rows = max(8, (target // 8) * 8)

    TB = min(block_rows, _round_up(B, 8))
    TB = max(8, (TB // 8) * 8)
    B_pad = _round_up(B, TB)
    num_tiles = B_pad // TB

    if B_pad != B:
        # Zero-padded rows have mu = logvar = 0  =>  exact 0 KL contribution.
        inputs = jnp.pad(inputs, ((0, B_pad - B), (0, 0)))
        eps = jnp.pad(eps, ((0, B_pad - B), (0, 0)))

    z, kl_part = pl.pallas_call(
        _reparam_kernel,
        grid=(num_tiles,),
        in_specs=[
            # mu: column block 0 of the concatenated inputs
            pl.BlockSpec((TB, D), lambda i: (i, 0)),
            # logvar: column block 1 of the concatenated inputs
            pl.BlockSpec((TB, D), lambda i: (i, 1)),
            # eps
            pl.BlockSpec((TB, D), lambda i: (i, 0)),
        ],
        out_specs=(
            pl.BlockSpec((TB, D), lambda i: (i, 0)),
            pl.BlockSpec((1, 1, D), lambda i: (i, 0, 0)),
        ),
        out_shape=(
            jax.ShapeDtypeStruct((B_pad, D), inputs.dtype),
            jax.ShapeDtypeStruct((num_tiles, 1, D), jnp.float32),
        ),
        compiler_params=pltpu.CompilerParams(
            dimension_semantics=("parallel",),
            vmem_limit_bytes=48 * 1024 * 1024,
        ),
    )(inputs, inputs, eps)

    kl = jnp.sum(kl_part)
    if B_pad != B:
        z = z[:B]
    return z, kl


if __name__ == "__main__":
    B, D = 12, 256  # small, lane-aligned D; B chosen to exercise padding

    key = jax.random.PRNGKey(0)
    k_in, k_eps = jax.random.split(key)
    inputs = jax.random.normal(k_in, (B, 2 * D), dtype=jnp.float32)
    eps = jax.random.normal(k_eps, (B, D), dtype=jnp.float32)

    # Multi-tile path (2 tiles of 8 rows, last tile zero-padded).
    z, kl = stochastic_layer_forward(inputs, eps, block_rows=8)
    jax.block_until_ready((z, kl))

    # Reference check in plain JAX.
    mu_ref = inputs[:, :D]
    lv_ref = inputs[:, D:]
    z_ref = mu_ref + jnp.exp(0.5 * lv_ref) * eps
    kl_ref = jnp.sum(-0.5 * (1.0 + lv_ref - mu_ref * mu_ref - jnp.exp(lv_ref)))
    assert z.shape == (B, D)
    assert jnp.allclose(z, z_ref, atol=1e-5, rtol=1e-5)
    assert jnp.allclose(kl, kl_ref, atol=1e-3, rtol=1e-4)

    # Auto-sized single-tile path.
    z2, kl2 = stochastic_layer_forward(inputs, eps)
    jax.block_until_ready((z2, kl2))
    assert jnp.allclose(z2, z_ref, atol=1e-5, rtol=1e-5)
    assert jnp.allclose(kl2, kl_ref, atol=1e-3, rtol=1e-4)

    print("KERNEL_OK")
</pallas_src>

<mosaic_0001>
module attributes {stable_mosaic.version = 11 : i64} {
  func.func @_reparam_kernel(%arg0: i32, %arg1: memref<8x256xf32, #tpu.memory_space<vmem>>, %arg2: memref<8x256xf32, #tpu.memory_space<vmem>>, %arg3: memref<8x256xf32, #tpu.memory_space<vmem>>, %arg4: memref<8x256xf32, #tpu.memory_space<vmem>>, %arg5: memref<1x1x256xf32, #tpu.memory_space<vmem>>) attributes {dimension_semantics = [#tpu.dimension_semantics<parallel>], iteration_bounds = array<i64: 2>, scalar_prefetch = 0 : i64, scratch_operands = 0 : i64, tpu.core_type = #tpu.core_type<tc>, window_params = [{transform_indices = @transform_0, window_bounds = array<i64: 8, 256>}, {transform_indices = @transform_1, window_bounds = array<i64: 8, 256>}, {transform_indices = @transform_2, window_bounds = array<i64: 8, 256>}, {transform_indices = @transform_3, window_bounds = array<i64: 8, 256>}, {transform_indices = @transform_4, window_bounds = array<i64: 1, 1, 256>}]} {
    %c0 = arith.constant 0 : index
    %c0_0 = arith.constant 0 : index
    %0 = vector.load %arg1[%c0, %c0_0] : memref<8x256xf32, #tpu.memory_space<vmem>>, vector<8x256xf32>
    %c0_1 = arith.constant 0 : index
    %c0_2 = arith.constant 0 : index
    %1 = vector.load %arg2[%c0_1, %c0_2] : memref<8x256xf32, #tpu.memory_space<vmem>>, vector<8x256xf32>
    %c0_3 = arith.constant 0 : index
    %c0_4 = arith.constant 0 : index
    %2 = vector.load %arg3[%c0_3, %c0_4] : memref<8x256xf32, #tpu.memory_space<vmem>>, vector<8x256xf32>
    %cst = arith.constant 5.000000e-01 : f32
    %3 = vector.broadcast %cst : f32 to vector<8x256xf32>
    %4 = arith.mulf %3, %1 : vector<8x256xf32>
    %5 = math.exp %4 : vector<8x256xf32>
    %6 = arith.mulf %5, %2 : vector<8x256xf32>
    %7 = arith.addf %0, %6 : vector<8x256xf32>
    %c0_5 = arith.constant 0 : index
    %c0_6 = arith.constant 0 : index
    %8 = vector.load %arg4[%c0_5, %c0_6] : memref<8x256xf32, #tpu.memory_space<vmem>>, vector<8x256xf32>
    tpu.vector_store %arg4[%c0_5, %c0_6], %7 {strides = array<i32>} : memref<8x256xf32, #tpu.memory_space<vmem>>, vector<8x256xf32>,
    %9 = arith.mulf %5, %5 : vector<8x256xf32>
    %cst_7 = arith.constant 1.000000e+00 : f32
    %10 = vector.broadcast %cst_7 : f32 to vector<8x256xf32>
    %11 = arith.addf %10, %1 : vector<8x256xf32>
    %12 = arith.mulf %0, %0 : vector<8x256xf32>
    %13 = arith.subf %11, %12 : vector<8x256xf32>
    %14 = arith.subf %13, %9 : vector<8x256xf32>
    %cst_8 = arith.constant -5.000000e-01 : f32
    %15 = vector.broadcast %cst_8 : f32 to vector<8x256xf32>
    %16 = arith.mulf %15, %14 : vector<8x256xf32>
    %cst_9 = arith.constant dense<0.000000e+00> : vector<256xf32>
    %17 = vector.multi_reduction <add>, %16, %cst_9 [0] : vector<8x256xf32> to vector<256xf32>
    %18 = vector.shape_cast %17 : vector<256xf32> to vector<1x1x256xf32>
    %c0_10 = arith.constant 0 : index
    %c0_11 = arith.constant 0 : index
    %c0_12 = arith.constant 0 : index
    %19 = vector.load %arg5[%c0_10, %c0_11, %c0_12] : memref<1x1x256xf32, #tpu.memory_space<vmem>>, vector<1x1x256xf32>
    tpu.vector_store %arg5[%c0_10, %c0_11, %c0_12], %18 {strides = array<i32>} : memref<1x1x256xf32, #tpu.memory_space<vmem>>, vector<1x1x256xf32>,
    return
  }
  func.func @transform_0(%arg0: i32) -> (i32, i32) {
    %c0_i32 = arith.constant 0 : i32
    %c0_i32_0 = arith.constant 0 : i32
    return %arg0, %c0_i32 : i32, i32
  }
  func.func @transform_1(%arg0: i32) -> (i32, i32) {
    %c1_i32 = arith.constant 1 : i32
    %c0_i32 = arith.constant 0 : i32
    return %arg0, %c1_i32 : i32, i32
  }
  func.func @transform_2(%arg0: i32) -> (i32, i32) {
    %c0_i32 = arith.constant 0 : i32
    %c0_i32_0 = arith.constant 0 : i32
    return %arg0, %c0_i32 : i32, i32
  }
  func.func @transform_3(%arg0: i32) -> (i32, i32) {
    %c0_i32 = arith.constant 0 : i32
    %c0_i32_0 = arith.constant 0 : i32
    return %arg0, %c0_i32 : i32, i32
  }
  func.func @transform_4(%arg0: i32) -> (i32, i32, i32) {
    %c0_i32 = arith.constant 0 : i32
    %c0_i32_0 = arith.constant 0 : i32
    %c0_i32_1 = arith.constant 0 : i32
    return %arg0, %c0_i32, %c0_i32_0 : i32, i32, i32
  }
}

</mosaic_0001>

<llo_original>
// kernel: tpu_custom_call.1
$region0: #{tpu_custom_call.1}
  #allocation0 [shape = 'u32[]', space=smem, size = 0x4, offset = 0x4, fixed_abs, tag = 'smem constant byte address 0x4 - core index']
  #allocation1 [shape = 'u32[144,128]{1,0:T(1,128)}', space=vmem, size = 0x12000, scoped, tag = 'internal scratch']
  %s0 = inlined_call_operand.hbm [shape: f32[16,512], index: 0, kind: input, shape index: {}]
  %s1 = inlined_call_operand.hbm [shape: f32[16,512], index: 1, kind: input, shape index: {}]
  %s2 = inlined_call_operand.hbm [shape: f32[16,256], index: 2, kind: input, shape index: {}]
  %s3 = inlined_call_operand.hbm [shape: f32[16,256], index: 3, kind: output, shape index: {0}]
  %s4 = inlined_call_operand.hbm [shape: f32[2,1,256], index: 4, kind: output, shape index: {1}]
  %5 = xla_tuple %s3, %s4
  %s6 = sld [smem:[#allocation0]]
  $region65: #{tpu_custom_call.1} parent=0
    _
  %s8 = ssub.s32 1, %s6
  %s9 = scalar_select 0, %s8, %s6
  $region1: #{tpu_custom_call.1} parent=0
    #allocation2 [shape = 'u8[16384]{0}', space=vmem, size = 0x4000, scoped, tag = 'input window, operand 0']
    #allocation3 [shape = 's32[2]{0}', space=sflag, size = 0x8, scoped, tag = 'scoped memory for tpu_custom_call.1']
    #allocation4 [shape = 's32[2]{0}', space=sflag, size = 0x8, scoped, tag = 'scoped memory for tpu_custom_call.1']
    #allocation5 [shape = 'u8[16384]{0}', space=vmem, size = 0x4000, scoped, tag = 'input window, operand 1']
    #allocation6 [shape = 's32[2]{0}', space=sflag, size = 0x8, scoped, tag = 'scoped memory for tpu_custom_call.1']
    #allocation7 [shape = 'u8[16384]{0}', space=vmem, size = 0x4000, scoped, tag = 'input window, operand 2']
    #allocation8 [shape = 'u8[16384]{0}', space=vmem, size = 0x4000, scoped, tag = 'output window, operand 0']
    #allocation9 [shape = 'u8[2048]{0}', space=vmem, size = 0x800, scoped, tag = 'output window, operand 1']
    #allocation10 [shape = 's32[2]{0}', space=sflag, size = 0x8, scoped, tag = 'scoped memory for tpu_custom_call.1']
    %10 = vsyncpa [#allocation3], 0
    %s11 = scalar_lea.sflag [#allocation3], 1
    %12 = vsyncpa %s11, 0
    %13 = vsyncpa [#allocation6], 0
    %s14 = scalar_lea.sflag [#allocation6], 1
    %15 = vsyncpa %s14, 0
    %16 = vsyncpa [#allocation4], 0
    %s17 = scalar_lea.sflag [#allocation4], 1
    %18 = vsyncpa %s17, 0
    %19 = vsyncpa [#allocation10], 0
    %s20 = scalar_lea.sflag [#allocation10], 1
    %21 = vsyncpa %s20, 0
    loop: start=0, step=1, limit=4
    $region2: #{tpu_custom_call.1} parent=1 // loop_pre_header
      _
    $region3: #{tpu_custom_call.1} parent=1 // loop_header
      %s23 = sphi 0, %s27
      %p24 = scmp.ge.s32.totalorder %s23, 4
      %s33 = sphi 0, %s35
      %s36 = sphi 0, %s33
      %s37 = sphi 0, %s36
      %s53 = sphi 0, %s37
      %s59 = sphi 0, %s61
      %s62 = sphi 0, %s59
      %s63 = sphi 0, %s62
      %s79 = sphi 0, %s63
      %s85 = sphi 0, %s87
      %s88 = sphi 0, %s85
      %s89 = sphi 0, %s88
      %s105 = sphi 0, %s89
      %s111 = sphi 0, %s113
      %s114 = sphi 0, %s111
      %s115 = sphi 0, %s114
      %s131 = sphi 0, %s115
      %s137 = sphi 0, %s139
      %s140 = sphi 0, %s137
      %s141 = sphi 0, %s140
      %s157 = sphi 0, %s141
    $region4: #{tpu_custom_call.1} parent=1 // loop_header_branch
      %26 = sbr.rel (%p24) target = $region8
    $region5: #{tpu_custom_call.1} parent=1 // loop_body
      %s28 = ssub.s32 %s23, 1
      %s29 = ssub.s32 %s23, 2
      %s30 = sadd.s32 %s23, 1
      %s31 = ssub.s32 %s23, %s30
      %p32 = scmp.eq.s32.totalorder %s31, 0
      %s34 = sadd.s32 %s33, 1
      %s35 = scalar_select %p32, %s33, %s34
      %p38 = pneg %p32
      %p39 = scmp.eq.s32.totalorder %s23, 1
      %p40 = por %p38, %p39
      %p41 = scmp.ne.s32.totalorder %s33, %s36
      %p42 = scmp.eq.s32.totalorder %s23, 0
      %p43 = por %p41, %p42
      %p44 = scmp.ne.s32.totalorder %s33, %s36
      %p45 = scmp.eq.s32.totalorder %s28, 1
      %p46 = por %p44, %p45
      %p47 = scmp.ne.s32.totalorder %s36, %s37
      %p48 = scmp.eq.s32.totalorder %s28, 0
      %p49 = por %p47, %p48
      %p50 = scmp.ne.s32.totalorder %s36, %s37
      %p51 = scmp.eq.s32.totalorder %s29, 1
      %p52 = por %p50, %p51
      %p54 = scmp.ne.s32.totalorder %s37, %s53
      %p55 = scmp.eq.s32.totalorder %s29, 0
      %p56 = por %p54, %p55
      %s57 = ssub.s32 %s23, %s30
      %p58 = scmp.eq.s32.totalorder %s57, 0
      %s60 = sadd.s32 %s59, 1
      %s61 = scalar_select %p58, %s59, %s60
      %p64 = pneg %p58
      %p65 = scmp.eq.s32.totalorder %s23, 1
      %p66 = por %p64, %p65
      %p67 = scmp.ne.s32.totalorder %s59, %s62
      %p68 = scmp.eq.s32.totalorder %s23, 0
      %p69 = por %p67, %p68
      %p70 = scmp.ne.s32.totalorder %s59, %s62
      %p71 = scmp.eq.s32.totalorder %s28, 1
      %p72 = por %p70, %p71
      %p73 = scmp.ne.s32.totalorder %s62, %s63
      %p74 = scmp.eq.s32.totalorder %s28, 0
      %p75 = por %p73, %p74
      %p76 = scmp.ne.s32.totalorder %s62, %s63
      %p77 = scmp.eq.s32.totalorder %s29, 1
      %p78 = por %p76, %p77
      %p80 = scmp.ne.s32.totalorder %s63, %s79
      %p81 = scmp.eq.s32.totalorder %s29, 0
      %p82 = por %p80, %p81
      %s83 = ssub.s32 %s23, %s30
      %p84 = scmp.eq.s32.totalorder %s83, 0
      %s86 = sadd.s32 %s85, 1
      %s87 = scalar_select %p84, %s85, %s86
      %p90 = pneg %p84
      %p91 = scmp.eq.s32.totalorder %s23, 1
      %p92 = por %p90, %p91
      %p93 = scmp.ne.s32.totalorder %s85, %s88
      %p94 = scmp.eq.s32.totalorder %s23, 0
      %p95 = por %p93, %p94
      %p96 = scmp.ne.s32.totalorder %s85, %s88
      %p97 = scmp.eq.s32.totalorder %s28, 1
      %p98 = por %p96, %p97
      %p99 = scmp.ne.s32.totalorder %s88, %s89
      %p100 = scmp.eq.s32.totalorder %s28, 0
      %p101 = por %p99, %p100
      %p102 = scmp.ne.s32.totalorder %s88, %s89
      %p103 = scmp.eq.s32.totalorder %s29, 1
      %p104 = por %p102, %p103
      %p106 = scmp.ne.s32.totalorder %s89, %s105
      %p107 = scmp.eq.s32.totalorder %s29, 0
      %p108 = por %p106, %p107
      %s109 = ssub.s32 %s23, %s30
      %p110 = scmp.eq.s32.totalorder %s109, 0
      %s112 = sadd.s32 %s111, 1
      %s113 = scalar_select %p110, %s111, %s112
      %p116 = pneg %p110
      %p117 = scmp.eq.s32.totalorder %s23, 1
      %p118 = por %p116, %p117
      %p119 = scmp.ne.s32.totalorder %s111, %s114
      %p120 = scmp.eq.s32.totalorder %s23, 0
      %p121 = por %p119, %p120
      %p122 = scmp.ne.s32.totalorder %s111, %s114
      %p123 = scmp.eq.s32.totalorder %s28, 1
      %p124 = por %p122, %p123
      %p125 = scmp.ne.s32.totalorder %s114, %s115
      %p126 = scmp.eq.s32.totalorder %s28, 0
      %p127 = por %p125, %p126
      %p128 = scmp.ne.s32.totalorder %s114, %s115
      %p129 = scmp.eq.s32.totalorder %s29, 1
      %p130 = por %p128, %p129
      %p132 = scmp.ne.s32.totalorder %s115, %s131
      %p133 = scmp.eq.s32.totalorder %s29, 0
      %p134 = por %p132, %p133
      %s135 = ssub.s32 %s23, %s30
      %p136 = scmp.eq.s32.totalorder %s135, 0
      %s138 = sadd.s32 %s137, 1
      %s139 = scalar_select %p136, %s137, %s138
      %p142 = pneg %p136
      %p143 = scmp.eq.s32.totalorder %s23, 1
      %p144 = por %p142, %p143
      %p145 = scmp.ne.s32.totalorder %s137, %s140
      %p146 = scmp.eq.s32.totalorder %s23, 0
      %p147 = por %p145, %p146
      %p148 = scmp.ne.s32.totalorder %s137, %s140
      %p149 = scmp.eq.s32.totalorder %s28, 1
      %p150 = por %p148, %p149
      %p151 = scmp.ne.s32.totalorder %s140, %s141
      %p152 = scmp.eq.s32.totalorder %s28, 0
      %p153 = por %p151, %p152
      %p154 = scmp.ne.s32.totalorder %s140, %s141
      %p155 = scmp.eq.s32.totalorder %s29, 1
      %p156 = por %p154, %p155
      %p158 = scmp.ne.s32.totalorder %s141, %s157
      %p159 = scmp.eq.s32.totalorder %s29, 0
      %p160 = por %p158, %p159
      %p161 = scmp.le.s32.totalorder 1, %s23
      %p162 = scmp.lt.s32.totalorder %s23, 3
      %p163 = pnand %p161, %p162
      %p164 = pneg %p163
      // Predicated region
      $region9: #{tpu_custom_call.1} parent=5 // pred_check
        _
      $region10: #{tpu_custom_call.1} parent=5 // pred_check_branch
        %166 = sbr.rel (%p163) target = $region12
      $region11: #{tpu_custom_call.1} parent=5 // pred_region
        %s167 = ssub.s32 %s23, 1
      $region12: #{tpu_custom_call.1} parent=5 // pred_fallthru
        _
      %p168 = scmp.lt.s32.totalorder %s23, 2
      // Predicated region
      $region13: #{tpu_custom_call.1} parent=5 // pred_check
        %p169 = pneg %p168
      $region14: #{tpu_custom_call.1} parent=5 // pred_check_branch
        %171 = sbr.rel (%p169) target = $region16
      $region15: #{tpu_custom_call.1} parent=5 // pred_region
        // Predicated region
        $region17: #{tpu_custom_call.1} parent=15 // pred_check
          %p172 = pneg %p43
        $region18: #{tpu_custom_call.1} parent=15 // pred_check_branch
          %174 = sbr.rel (%p172) target = $region20
        $region19: #{tpu_custom_call.1} parent=15 // pred_region
          %s175 = sand.u32 %s33, 1
          %s176 = scalar_lea.sflag [#allocation3], %s175
          %s177 = sand.u32 %s33, 1
          %s178 = smul.addr %s177, 16
          %s179 = scalar_lea.vmem [#allocation2], %s178
          %s181 = ssub.s32 256, 256
          %182 = vsyncadd %s176, %s181
          %s183 = smul.addr %s23, 4
          %s184 = smul.addr %s183, 128
          %s185 = scalar_lea.hbm %s0, %s184
          %s187 = sshll.u32 %s179, 4
          %s188 = int_to_ptr.vmem [resolvable:$true] %s187
          %190 = dma.hbm_to_vmem [thread:$0]  %s185, 256, %s188, %s176
        $region20: #{tpu_custom_call.1} parent=15 // pred_fallthru
          _
        // Predicated region
        $region21: #{tpu_custom_call.1} parent=15 // pred_check
          %p191 = pneg %p69
        $region22: #{tpu_custom_call.1} parent=15 // pred_check_branch
          %193 = sbr.rel (%p191) target = $region24
        $region23: #{tpu_custom_call.1} parent=15 // pred_region
          %s194 = sand.u32 %s23, 1
          %s195 = scalar_lea.sflag [#allocation6], %s194
          %s196 = sand.u32 %s59, 1
          %s197 = smul.addr %s196, 16
          %s198 = scalar_lea.vmem [#allocation5], %s197
          %s200 = ssub.s32 256, 256
          %201 = vsyncadd %s195, %s200
          %s202 = smul.addr %s23, 4
          %s203 = sadd.s32 2, %s202
          %s204 = smul.addr %s203, 128
          %s205 = scalar_lea.hbm %s1, %s204
          %s207 = sshll.u32 %s198, 4
          %s208 = int_to_ptr.vmem [resolvable:$true] %s207
          %210 = dma.hbm_to_vmem [thread:$0]  %s205, 256, %s208, %s195
        $region24: #{tpu_custom_call.1} parent=15 // pred_fallthru
          _
        // Predicated region
        $region25: #{tpu_custom_call.1} parent=15 // pred_check
          %p211 = pneg %p95
        $region26: #{tpu_custom_call.1} parent=15 // pred_check_branch
          %213 = sbr.rel (%p211) target = $region28
        $region27: #{tpu_custom_call.1} parent=15 // pred_region
          %s214 = sand.u32 %s23, 1
          %s215 = scalar_lea.sflag [#allocation6], %s214
          %s216 = sand.u32 %s85, 1
          %s217 = smul.addr %s216, 16
          %s218 = scalar_lea.vmem [#allocation7], %s217
          %s220 = ssub.s32 256, 256
          %221 = vsyncadd %s215, %s220
          %s222 = smul.addr %s23, 2
          %s223 = smul.addr %s222, 128
          %s224 = scalar_lea.hbm %s2, %s223
          %s226 = sshll.u32 %s218, 4
          %s227 = int_to_ptr.vmem [resolvable:$true] %s226
          %229 = dma.hbm_to_vmem [thread:$0]  %s224, 256, %s227, %s215
        $region28: #{tpu_custom_call.1} parent=15 // pred_fallthru
          _
      $region16: #{tpu_custom_call.1} parent=5 // pred_fallthru
        _
      %p230 = scmp.le.s32.totalorder 1, %s23
      %p231 = scmp.lt.s32.totalorder %s23, 3
      %p232 = pnand %p230, %p231
      %p233 = pneg %p232
      // Predicated region
      $region29: #{tpu_custom_call.1} parent=5 // pred_check
        _
      $region30: #{tpu_custom_call.1} parent=5 // pred_check_branch
        %235 = sbr.rel (%p232) target = $region32
      $region31: #{tpu_custom_call.1} parent=5 // pred_region
        %s236 = ssub.s32 %s23, 1
        %s237 = sand.u32 %s36, 1
        %s238 = scalar_lea.sflag [#allocation3], %s237
        %s239 = sand.u32 %s36, 1
        %s240 = smul.addr %s239, 16
        %s241 = scalar_lea.vmem [#allocation2], %s240
        // Predicated region
        $region33: #{tpu_custom_call.1} parent=31 // pred_check
          %p242 = pneg %p49
        $region34: #{tpu_custom_call.1} parent=31 // pred_check_branch
          %244 = sbr.rel (%p242) target = $region36
        $region35: #{tpu_custom_call.1} parent=31 // pred_region
          %245 = dma.done %s238, 256
        $region36: #{tpu_custom_call.1} parent=31 // pred_fallthru
          _
        %s246 = sand.u32 %s28, 1
        %s247 = scalar_lea.sflag [#allocation6], %s246
        %s248 = sand.u32 %s62, 1
        %s249 = smul.addr %s248, 16
        %s250 = scalar_lea.vmem [#allocation5], %s249
        // Predicated region
        $region37: #{tpu_custom_call.1} parent=31 // pred_check
          %p251 = pneg %p75
        $region38: #{tpu_custom_call.1} parent=31 // pred_check_branch
          %253 = sbr.rel (%p251) target = $region40
        $region39: #{tpu_custom_call.1} parent=31 // pred_region
          %254 = dma.done %s247, 256
        $region40: #{tpu_custom_call.1} parent=31 // pred_fallthru
          _
        %s255 = sand.u32 %s28, 1
        %s256 = scalar_lea.sflag [#allocation6], %s255
        %s257 = sand.u32 %s88, 1
        %s258 = smul.addr %s257, 16
        %s259 = scalar_lea.vmem [#allocation7], %s258
        // Predicated region
        $region41: #{tpu_custom_call.1} parent=31 // pred_check
          %p260 = pneg %p101
        $region42: #{tpu_custom_call.1} parent=31 // pred_check_branch
          %262 = sbr.rel (%p260) target = $region44
        $region43: #{tpu_custom_call.1} parent=31 // pred_region
          %263 = dma.done %s256, 256
        $region44: #{tpu_custom_call.1} parent=31 // pred_fallthru
          _
        %s264 = sand.u32 %s36, 1
        %s265 = scalar_lea.sflag [#allocation3], %s264
        %s266 = sand.u32 %s36, 1
        %s267 = smul.addr %s266, 16
        %s268 = scalar_lea.vmem [#allocation2], %s267
        %p269 = pneg %p49
        %p270 = pneg %p46
        %s271 = sand.u32 %s28, 1
        %s272 = scalar_lea.sflag [#allocation6], %s271
        %s273 = sand.u32 %s62, 1
        %s274 = smul.addr %s273, 16
        %s275 = scalar_lea.vmem [#allocation5], %s274
        %p276 = pneg %p75
        %p277 = pneg %p72
        %s278 = sand.u32 %s28, 1
        %s279 = scalar_lea.sflag [#allocation6], %s278
        %s280 = sand.u32 %s88, 1
        %s281 = smul.addr %s280, 16
        %s282 = scalar_lea.vmem [#allocation7], %s281
        %p283 = pneg %p101
        %p284 = pneg %p98
        %p285 = pneg %p127
        %p286 = pneg %p124
        %s287 = sand.u32 %s114, 1
        %s288 = scalar_lea.sflag [#allocation4], %s287
        %s289 = sand.u32 %s114, 1
        %s290 = smul.addr %s289, 16
        %s291 = scalar_lea.vmem [#allocation8], %s290
        %p292 = pneg %p153
        %p293 = pneg %p150
        %s294 = sand.u32 %s140, 1
        %s295 = scalar_lea.sflag [#allocation10], %s294
        %s296 = sand.u32 %s140, 1
        %s297 = smul.addr %s296, 2
        %s298 = scalar_lea.vmem [#allocation9], %s297
        %v299 = vld [vmem:[%s241] sm:$0xff]
        %v300 = vld [vmem:[%s241 + $0x8] sm:$0xff]
        %v301 = vld [vmem:[%s250] sm:$0xff]
        %v302 = vld [vmem:[%s250 + $0x8] sm:$0xff]
        %v303 = vld [vmem:[%s259] sm:$0xff]
        %v304 = vld [vmem:[%s259 + $0x8] sm:$0xff]
        %v305 = vmul.f32 %v301, 0.5
        %v306 = vmul.f32 %v302, 0.5
        %v307 = vmul.f32 %v305, 1.442695
        %v308 = vpow.pop %v307
        %v309 = vmul.f32 %v306, 1.442695
        %v310 = vpow.pop %v309
        %v311 = vmul.f32 %v308, %v303
        %v312 = vmul.f32 %v310, %v304
        %v313 = vadd.f32 %v299, %v311
        %v314 = vadd.f32 %v300, %v312
        %315 = vst [vmem:[%s291] sm:$0xff] %v313
        %316 = vst [vmem:[%s291 + $0x8] sm:$0xff] %v314
        %v317 = vmul.f32 %v308, %v308
        %v318 = vmul.f32 %v310, %v310
        %v319 = vadd.f32 %v301, 1.0
        %v320 = vadd.f32 %v302, 1.0
        %v321 = vmul.f32 %v299, %v299
        %v322 = vmul.f32 %v300, %v300
        %v323 = vsub.f32 %v319, %v321
        %v324 = vsub.f32 %v320, %v322
        %v325 = vsub.f32 %v323, %v317
        %v326 = vsub.f32 %v324, %v318
        %v327 = vmul.f32 %v325, -0.5
        %v328 = vmul.f32 %v326, -0.5
        %v329 = vrot.slane %v327, 4
        %v330 = vadd.f32 %v327, %v329
        %v331 = vrot.slane %v330, 2
        %v332 = vadd.f32 %v330, %v331
        %v333 = vrot.slane %v332, 1
        %v334 = vadd.f32 %v332, %v333
        %v335 = vrot.slane %v328, 4
        %v336 = vadd.f32 %v328, %v335
        %v337 = vrot.slane %v336, 2
        %v338 = vadd.f32 %v336, %v337
        %v339 = vrot.slane %v338, 1
        %v340 = vadd.f32 %v338, %v339
        %v343 = vcombine.low %v334, %v340
        %v345 = vunpack.c.l.s4 1966171168
        %v346 = vunpack.c.0.s8 %v345
        %v347 = vlaneseq
        %v348 = vshrl.u32 %v347, 7
        %v349 = vsub.s32 %v346, %v348
        %v350 = vrot.slane %v343, %v349
        %v352 = vunpack.c.l.s4 1966171168
        %v353 = vunpack.c.0.s8 %v352
        %v354 = vlaneseq
        %v355 = vshrl.u32 %v354, 7
        %v356 = vsub.s32 %v353, %v355
        %v357 = vrot.slane %v350, %v356
        %v359 = vlaneseq
        %vm360 = vcmp.ge.s32.totalorder %v359, 0
        %vm361 = vcmp.lt.s32.totalorder %v359, 256
        %vm362 = vmand %vm360, %vm361
        %363 = vst.msk [vmem:[%s298] sm:$0x3] %vm362, %v357
        %s364 = sand.u32 %s114, 1
        %s365 = scalar_lea.sflag [#allocation4], %s364
        %s366 = sand.u32 %s114, 1
        %s367 = smul.addr %s366, 16
        %s368 = scalar_lea.vmem [#allocation8], %s367
        %s369 = sand.u32 %s140, 1
        %s370 = scalar_lea.sflag [#allocation10], %s369
        %s371 = sand.u32 %s140, 1
        %s372 = smul.addr %s371, 2
        %s373 = scalar_lea.vmem [#allocation9], %s372
        // Predicated region
        $region45: #{tpu_custom_call.1} parent=31 // pred_check
          %p374 = pneg %p124
        $region46: #{tpu_custom_call.1} parent=31 // pred_check_branch
          %376 = sbr.rel (%p374) target = $region48
        $region47: #{tpu_custom_call.1} parent=31 // pred_region
          %s378 = ssub.s32 256, 256
          %379 = vsyncadd %s365, %s378
          %s380 = smul.addr %s28, 2
          %s381 = smul.addr %s380, 128
          %s382 = scalar_lea.hbm %s3, %s381
          %s384 = sshll.u32 %s368, 4
          %s385 = int_to_ptr.vmem [resolvable:$true] %s384
          %387 = dma.vmem_to_hbm [thread:$0]  %s385, 256, %s382, %s365
        $region48: #{tpu_custom_call.1} parent=31 // pred_fallthru
          _
        // Predicated region
        $region49: #{tpu_custom_call.1} parent=31 // pred_check
          %p388 = pneg %p150
        $region50: #{tpu_custom_call.1} parent=31 // pred_check_branch
          %390 = sbr.rel (%p388) target = $region52
        $region51: #{tpu_custom_call.1} parent=31 // pred_region
          %s392 = ssub.s32 32, 32
          %393 = vsyncadd %s370, %s392
          %s394 = smul.addr %s28, 2
          %s395 = smul.addr %s394, 16
          %s396 = scalar_lea.hbm %s4, %s395
          %s398 = sshll.u32 %s373, 4
          %s399 = int_to_ptr.vmem [resolvable:$true] %s398
          %401 = dma.vmem_to_hbm [thread:$0]  %s399, 32, %s396, %s370
        $region52: #{tpu_custom_call.1} parent=31 // pred_fallthru
          _
      $region32: #{tpu_custom_call.1} parent=5 // pred_fallthru
        _
      %p402 = scmp.le.s32.totalorder 2, %s23
      // Predicated region
      $region53: #{tpu_custom_call.1} parent=5 // pred_check
        %p403 = pneg %p402
      $region54: #{tpu_custom_call.1} parent=5 // pred_check_branch
        %405 = sbr.rel (%p403) target = $region56
      $region55: #{tpu_custom_call.1} parent=5 // pred_region
        %s406 = ssub.s32 %s23, 2
        // Predicated region
        $region57: #{tpu_custom_call.1} parent=55 // pred_check
          %p407 = pneg %p130
        $region58: #{tpu_custom_call.1} parent=55 // pred_check_branch
          %409 = sbr.rel (%p407) target = $region60
        $region59: #{tpu_custom_call.1} parent=55 // pred_region
          %s410 = sand.u32 %s115, 1
          %s411 = scalar_lea.sflag [#allocation4], %s410
          %s412 = sand.u32 %s115, 1
          %s413 = smul.addr %s412, 16
          %s414 = scalar_lea.vmem [#allocation8], %s413
          %415 = dma.done %s411, 256
        $region60: #{tpu_custom_call.1} parent=55 // pred_fallthru
          _
        // Predicated region
        $region61: #{tpu_custom_call.1} parent=55 // pred_check
          %p416 = pneg %p156
        $region62: #{tpu_custom_call.1} parent=55 // pred_check_branch
          %418 = sbr.rel (%p416) target = $region64
        $region63: #{tpu_custom_call.1} parent=55 // pred_region
          %s419 = sand.u32 %s141, 1
          %s420 = scalar_lea.sflag [#allocation10], %s419
          %s421 = sand.u32 %s141, 1
          %s422 = smul.addr %s421, 2
          %s423 = scalar_lea.vmem [#allocation9], %s422
          %424 = dma.done %s420, 32
        $region64: #{tpu_custom_call.1} parent=55 // pred_fallthru
          _
      $region56: #{tpu_custom_call.1} parent=5 // pred_fallthru
        _
    $region6: #{tpu_custom_call.1} parent=1 // loop_footer
      %s27 = sadd.s32 1, %s23
    $region7: #{tpu_custom_call.1} parent=1 // loop_footer_branch
      %22 = sbr.rel target = $region3
    $region8: #{tpu_custom_call.1} parent=1 // loop_exit
      _
    %425 = vsyncpa [#allocation3], 1
    %s426 = scalar_lea.sflag [#allocation3], 1
    %427 = vsyncpa %s426, 1
    %428 = vsyncpa [#allocation6], 1
    %s429 = scalar_lea.sflag [#allocation6], 1
    %430 = vsyncpa %s429, 1
    %431 = vsyncpa [#allocation4], 1
    %s432 = scalar_lea.sflag [#allocation4], 1
    %433 = vsyncpa %s432, 1
    %434 = vsyncpa [#allocation10], 1
    %s435 = scalar_lea.sflag [#allocation10], 1
    %436 = vsyncpa %s435, 1

</llo_original>
